<compile_context>
chip_gen: v6e
topology: v6e:2x2x1
jax: 0.10.0
libtpu: 0.0.40
codegen_flags: <defaults>
</compile_context>

<pallas_src>
import functools

import jax
import jax.numpy as jnp
from jax.experimental import pallas as pl
from jax.experimental.pallas import tpu as pltpu

_LANES = 128
_ROW_CAP = 4096          # (4096, 128) f32 block = 2 MiB per buffer


def _round_up(a, b):
    return ((a + b - 1) // b) * b


def _prod(dims):
    p = 1
    for d in dims:
        p *= d
    return p


# -----------------------------------------------------------------------------
# Elementwise activations (sigmoid / tanh / clamp), lane-dense gridded pipeline.
# -----------------------------------------------------------------------------
def _elementwise_kernel(x_ref, o_ref, *, op, lo=0.0, hi=1.0):
    x = x_ref[...]
    if op == "sigmoid":
        y = jax.nn.sigmoid(x)          # exp lives on the EUP slot; no VPU divide
    elif op == "tanh":
        y = jnp.tanh(x)
    elif op == "clamp":
        y = jnp.clip(x, lo, hi)
    else:
        raise ValueError(f"unknown elementwise op {op}")
    o_ref[...] = y.astype(o_ref.dtype)


def _elementwise(x, op, **kw):
    shape, dtype = x.shape, x.dtype
    flat = x.reshape(-1)                     # contiguous flatten: free relayout
    size = flat.shape[0]
    padded = _round_up(size, _LANES)
    if padded != size:
        # TODO(synk): rare ragged case (numel % 128 != 0) pays one pad + slice pass.
        flat = jnp.pad(flat, (0, padded - size))
    rows = padded // _LANES
    x2 = flat.reshape(rows, _LANES)          # lane-dense, full-width vst

    tm = rows if rows <= _ROW_CAP else _ROW_CAP
    grid = pl.cdiv(rows, tm)

    out2 = pl.pallas_call(
        functools.partial(_elementwise_kernel, op=op, **kw),
        out_shape=jax.ShapeDtypeStruct((rows, _LANES), dtype),
        grid=(grid,),
        in_specs=[pl.BlockSpec((tm, _LANES), lambda i: (i, 0))],
        out_specs=pl.BlockSpec((tm, _LANES), lambda i: (i, 0)),
        compiler_params=pltpu.CompilerParams(dimension_semantics=("parallel",)),
    )(x2)

    out = out2.reshape(padded)
    if padded != size:
        out = out[:size]
    return out.reshape(shape)


# -----------------------------------------------------------------------------
# Channel-dim (dim=1) softmax / log-softmax.  C is a leading, non-tiled axis;
# the spatial extent fills the (sublane, lane) tile and is gridded.
# -----------------------------------------------------------------------------
def _channel_softmax_kernel(x_ref, o_ref, *, log):
    x = x_ref[...].astype(jnp.float32)                    # (1, C, TR, 128) or (1, C, M)
    m = jnp.max(x, axis=1, keepdims=True)                 # elementwise across C slabs
    e = jnp.exp(x - m)
    s = jnp.sum(e, axis=1, keepdims=True)
    if log:
        y = (x - m) - jnp.log(s)
    else:
        y = e / s
    o_ref[...] = y.astype(o_ref.dtype)


def _spatial_tile_rows(c, rs):
    # target ~2 MiB of f32 per input block: C * TR * 128 * 4 bytes
    cap = max(8, ((2 * 1024 * 1024) // (c * _LANES * 4)) // 8 * 8)
    return rs if rs <= cap else cap


def _channel_softmax(x, log):
    n, c = x.shape[0], x.shape[1]
    m = _prod(x.shape[2:])
    dtype = x.dtype
    kern = functools.partial(_channel_softmax_kernel, log=log)

    if m > 0 and m % _LANES == 0:
        rs = m // _LANES
        tr = _spatial_tile_rows(c, rs)
        x4 = x.reshape(n, c, rs, _LANES)
        out = pl.pallas_call(
            kern,
            out_shape=jax.ShapeDtypeStruct((n, c, rs, _LANES), dtype),
            grid=(n, pl.cdiv(rs, tr)),
            in_specs=[pl.BlockSpec((1, c, tr, _LANES), lambda b, s: (b, 0, s, 0))],
            out_specs=pl.BlockSpec((1, c, tr, _LANES), lambda b, s: (b, 0, s, 0)),
            compiler_params=pltpu.CompilerParams(
                dimension_semantics=("parallel", "parallel")),
        )(x4)
        return out.reshape(x.shape)

    # Fallback: spatial extent not a multiple of 128 (or ndim==2): whole-spatial block.
    # TODO(synk): tile the spatial axis for very large non-128-divisible H*W.
    m = max(m, 1)
    x3 = x.reshape(n, c, m)
    out = pl.pallas_call(
        kern,
        out_shape=jax.ShapeDtypeStruct((n, c, m), dtype),
        grid=(n,),
        in_specs=[pl.BlockSpec((1, c, m), lambda b: (b, 0, 0))],
        out_specs=pl.BlockSpec((1, c, m), lambda b: (b, 0, 0)),
        compiler_params=pltpu.CompilerParams(dimension_semantics=("parallel",)),
    )(x3)
    return out.reshape(x.shape)


# -----------------------------------------------------------------------------
# Channel-dim (dim=1) argmax, same layout; int32 indices, first max wins.
# -----------------------------------------------------------------------------
def _channel_argmax_kernel(x_ref, o_ref):
    x = x_ref[...]                                        # (1, C, TR, 128) or (1, C, M)
    c = x.shape[1]
    ids = jax.lax.broadcasted_iota(jnp.int32, x.shape, 1)
    m = jnp.max(x, axis=1, keepdims=True)
    matches = x == m
    if jnp.issubdtype(x.dtype, jnp.floating):
        matches = matches | jnp.isnan(x)                  # NaN is maximal (torch behavior)
    idx = jnp.min(jnp.where(matches, ids, c), axis=1, keepdims=True)
    o_ref[...] = idx.astype(jnp.int32)


def _channel_argmax(x):
    n, c = x.shape[0], x.shape[1]
    spatial = x.shape[2:]
    m = _prod(spatial)

    if m > 0 and m % _LANES == 0:
        rs = m // _LANES
        tr = _spatial_tile_rows(c, rs)
        x4 = x.reshape(n, c, rs, _LANES)
        out = pl.pallas_call(
            _channel_argmax_kernel,
            out_shape=jax.ShapeDtypeStruct((n, 1, rs, _LANES), jnp.int32),
            grid=(n, pl.cdiv(rs, tr)),
            in_specs=[pl.BlockSpec((1, c, tr, _LANES), lambda b, s: (b, 0, s, 0))],
            out_specs=pl.BlockSpec((1, 1, tr, _LANES), lambda b, s: (b, 0, s, 0)),
            compiler_params=pltpu.CompilerParams(
                dimension_semantics=("parallel", "parallel")),
        )(x4)
        return out.reshape((n,) + spatial)

    # Fallback: whole-spatial block per batch element.
    m = max(m, 1)
    x3 = x.reshape(n, c, m)
    out = pl.pallas_call(
        _channel_argmax_kernel,
        out_shape=jax.ShapeDtypeStruct((n, 1, m), jnp.int32),
        grid=(n,),
        in_specs=[pl.BlockSpec((1, c, m), lambda b: (b, 0, 0))],
        out_specs=pl.BlockSpec((1, 1, m), lambda b: (b, 0, 0)),
        compiler_params=pltpu.CompilerParams(dimension_semantics=("parallel",)),
    )(x3)
    return out.reshape((n,) + spatial)


# -----------------------------------------------------------------------------
# Global argmax (dim=None): gridded streaming reduction with SMEM-carried state.
# -----------------------------------------------------------------------------
def _global_argmax_kernel(x_ref, o_ref, best_val, best_idx, *, size, tm):
    pid = pl.program_id(0)

    @pl.when(pid == 0)
    def _():
        best_val[...] = jnp.full((1,), -jnp.inf, dtype=jnp.float32)
        best_idx[...] = jnp.zeros((1,), dtype=jnp.int32)

    x = x_ref[...].astype(jnp.float32)                    # (TM, 128)
    r0 = pid * tm
    flat = ((r0 + jax.lax.broadcasted_iota(jnp.int32, x.shape, 0)) * _LANES
            + jax.lax.broadcasted_iota(jnp.int32, x.shape, 1))
    valid = flat < size
    xv = jnp.where(valid, x, -jnp.inf)                    # padded / overhang slots masked
    m = jnp.max(xv)
    idx = jnp.min(jnp.where(valid & (xv == m), flat, size))

    # Strict '>' keeps the earliest block's index for cross-block ties (first max wins).
    # TODO(synk): NaN is not treated as maximal across blocks (torch.argmax does).
    better = m > best_val[0]
    best_idx[0] = jnp.where(better, idx, best_idx[0])
    best_val[0] = jnp.where(better, m, best_val[0])

    @pl.when(pid == pl.num_programs(0) - 1)
    def _():
        o_ref[0] = best_idx[0]


def _global_argmax(x):
    flat = x.reshape(-1)
    size = flat.shape[0]
    padded = _round_up(size, _LANES)
    if padded != size:
        # TODO(synk): rare ragged case (numel % 128 != 0) pays one pad pass;
        # padded slots are masked out inside the kernel.
        flat = jnp.pad(flat, (0, padded - size))
    rows = padded // _LANES
    x2 = flat.reshape(rows, _LANES)

    tm = rows if rows <= _ROW_CAP else _ROW_CAP
    grid = pl.cdiv(rows, tm)

    out = pl.pallas_call(
        functools.partial(_global_argmax_kernel, size=size, tm=tm),
        out_shape=jax.ShapeDtypeStruct((1,), jnp.int32),
        grid=(grid,),
        in_specs=[pl.BlockSpec((tm, _LANES), lambda i: (i, 0))],
        out_specs=pl.BlockSpec(memory_space=pltpu.MemorySpace.SMEM),
        scratch_shapes=[pltpu.SMEM((1,), jnp.float32),
                        pltpu.SMEM((1,), jnp.int32)],
        compiler_params=pltpu.CompilerParams(dimension_semantics=("arbitrary",)),
    )(x2)
    return out[0]


# -----------------------------------------------------------------------------
# Activation factory mirroring the PyTorch `Activation(name, **params)` module.
# -----------------------------------------------------------------------------
def make_activation(name, **params):
    if name is None or name == "identity":
        return lambda x: x                                 # nn.Identity: no-op
    if name == "sigmoid":
        return lambda x: _elementwise(x, "sigmoid")
    if name in ("softmax", "softmax2d"):
        return lambda x: _channel_softmax(x, log=False)
    if name == "logsoftmax":
        return lambda x: _channel_softmax(x, log=True)
    if name == "tanh":
        return lambda x: _elementwise(x, "tanh")
    if name == "argmax":
        dim = params.get("dim", None)
        if dim is None:
            return _global_argmax
        if dim == 1:
            return _channel_argmax
        # TODO(synk): ArgMax over dims other than None / 1 is not implemented.
        raise NotImplementedError(f"argmax over dim={dim} not implemented")
    if name == "argmax2d":
        return _channel_argmax
    if name == "clamp":
        lo = float(params.get("min", 0))
        hi = float(params.get("max", 1))
        return lambda x: _elementwise(x, "clamp", lo=lo, hi=hi)
    if callable(name):
        # TODO(synk): arbitrary callable activation constructors are not supported.
        raise NotImplementedError("callable activation constructors not supported")
    raise ValueError(
        "Activation should be callable/sigmoid/softmax/logsoftmax/tanh/"
        f"argmax/argmax2d/clamp/None; got {name}")


def _max_abs_err(a, b):
    return float(jnp.max(jnp.abs(a.astype(jnp.float32) - b.astype(jnp.float32))))


if __name__ == "__main__":
    key = jax.random.PRNGKey(0)
    x = 2.0 * jax.random.normal(key, (2, 4, 16, 16), jnp.float32)   # NCHW

    # identity / None
    out = jax.block_until_ready(make_activation(None)(x))
    assert _max_abs_err(out, x) == 0.0

    # sigmoid
    out = jax.block_until_ready(make_activation("sigmoid")(x))
    err = _max_abs_err(out, jax.nn.sigmoid(x))
    assert err < 1e-4, f"sigmoid err {err}"

    # tanh
    out = jax.block_until_ready(make_activation("tanh")(x))
    err = _max_abs_err(out, jnp.tanh(x))
    assert err < 1e-4, f"tanh err {err}"

    # clamp
    out = jax.block_until_ready(make_activation("clamp", min=-0.5, max=0.5)(x))
    err = _max_abs_err(out, jnp.clip(x, -0.5, 0.5))
    assert err < 1e-6, f"clamp err {err}"

    # softmax / softmax2d (dim=1)
    out = jax.block_until_ready(make_activation("softmax")(x))
    err = _max_abs_err(out, jax.nn.softmax(x, axis=1))
    assert out.shape == x.shape and err < 1e-4, f"softmax err {err}"
    out2d = jax.block_until_ready(make_activation("softmax2d")(x))
    err = _max_abs_err(out2d, jax.nn.softmax(x, axis=1))
    assert err < 1e-4, f"softmax2d err {err}"

    # logsoftmax (dim=1)
    out = jax.block_until_ready(make_activation("logsoftmax")(x))
    err = _max_abs_err(out, jax.nn.log_softmax(x, axis=1))
    assert err < 1e-4, f"logsoftmax err {err}"

    # argmax2d (dim=1)
    out = jax.block_until_ready(make_activation("argmax2d")(x))
    assert out.shape == (2, 16, 16)
    assert bool(jnp.all(out == jnp.argmax(x, axis=1)))

    # argmax (dim=None, flattened)
    out = jax.block_until_ready(make_activation("argmax")(x))
    assert int(out) == int(jnp.argmax(x))

    # argmax (dim=1 via params)
    out = jax.block_until_ready(make_activation("argmax", dim=1)(x))
    assert bool(jnp.all(out == jnp.argmax(x, axis=1)))

    print("KERNEL_OK")
</pallas_src>

<mosaic_0001>
module attributes {stable_mosaic.version = 11 : i64} {
  func.func @_elementwise_kernel(%arg0: i32, %arg1: memref<16x128xf32, #tpu.memory_space<vmem>>, %arg2: memref<16x128xf32, #tpu.memory_space<vmem>>) attributes {dimension_semantics = [#tpu.dimension_semantics<parallel>], iteration_bounds = array<i64: 1>, scalar_prefetch = 0 : i64, scratch_operands = 0 : i64, tpu.core_type = #tpu.core_type<tc>, window_params = [{transform_indices = @transform_0, window_bounds = array<i64: 16, 128>}, {transform_indices = @transform_1, window_bounds = array<i64: 16, 128>}]} {
    %c0 = arith.constant 0 : index
    %c0_0 = arith.constant 0 : index
    %0 = vector.load %arg1[%c0, %c0_0] : memref<16x128xf32, #tpu.memory_space<vmem>>, vector<16x128xf32>
    %1 = arith.negf %0 : vector<16x128xf32>
    %2 = math.exp %1 : vector<16x128xf32>
    %cst = arith.constant 1.000000e+00 : f32
    %3 = vector.broadcast %cst : f32 to vector<16x128xf32>
    %4 = arith.addf %3, %2 : vector<16x128xf32>
    %5 = arith.divf %3, %4 : vector<16x128xf32>
    %c0_1 = arith.constant 0 : index
    %c0_2 = arith.constant 0 : index
    %6 = vector.load %arg2[%c0_1, %c0_2] : memref<16x128xf32, #tpu.memory_space<vmem>>, vector<16x128xf32>
    tpu.vector_store %arg2[%c0_1, %c0_2], %5 {strides = array<i32>} : memref<16x128xf32, #tpu.memory_space<vmem>>, vector<16x128xf32>,
    return
  }
  func.func @transform_0(%arg0: i32) -> (i32, i32) {
    %c0_i32 = arith.constant 0 : i32
    %c0_i32_0 = arith.constant 0 : i32
    return %arg0, %c0_i32 : i32, i32
  }
  func.func @transform_1(%arg0: i32) -> (i32, i32) {
    %c0_i32 = arith.constant 0 : i32
    %c0_i32_0 = arith.constant 0 : i32
    return %arg0, %c0_i32 : i32, i32
  }
}

</mosaic_0001>

<llo_original>
// kernel: tpu_custom_call.1
$region0: #{tpu_custom_call.1}
  #allocation0 [shape = 'u32[]', space=smem, size = 0x4, offset = 0x4, fixed_abs, tag = 'smem constant byte address 0x4 - core index']
  #allocation1 [shape = 'u32[144,128]{1,0:T(1,128)}', space=vmem, size = 0x12000, scoped, tag = 'internal scratch']
  %s0 = inlined_call_operand.hbm [shape: f32[16,128], index: 0, kind: input, shape index: {}]
  %s1 = inlined_call_operand.hbm [shape: f32[16,128], index: 1, kind: output, shape index: {}]
  %s2 = sld [smem:[#allocation0]]
  $region18: #{tpu_custom_call.1} parent=0
    _
  %s4 = ssub.s32 1, %s2
  %s5 = scalar_select 0, %s4, %s2
  $region1: #{tpu_custom_call.1} parent=0
    #allocation2 [shape = 'u8[8192]{0}', space=vmem, size = 0x2000, scoped, tag = 'input window, operand 0, single buffered']
    #allocation3 [shape = 's32[1]{0}', space=sflag, size = 0x4, scoped, tag = 'scoped memory for tpu_custom_call.1']
    #allocation4 [shape = 's32[1]{0}', space=sflag, size = 0x4, scoped, tag = 'scoped memory for tpu_custom_call.1']
    #allocation5 [shape = 'u8[8192]{0}', space=vmem, size = 0x2000, scoped, tag = 'output window, operand 0, single buffered']
    %6 = vsyncpa [#allocation3], 0
    %7 = vsyncpa [#allocation4], 0
    // Predicated region
    $region2: #{tpu_custom_call.1} parent=1 // pred_check
      _
    $region3: #{tpu_custom_call.1} parent=1 // pred_check_branch
      %9 = sbr.rel (0) target = $region5
    $region4: #{tpu_custom_call.1} parent=1 // pred_region
      %s11 = ssub.s32 256, 256
      %12 = vsyncadd [#allocation3], %s11
      %s13 = sshll.u32 [#allocation2], 4
      %s14 = int_to_ptr.vmem [resolvable:$true] %s13
      %19 = dma.hbm_to_vmem [thread:$0]  %s0, 256, %s14, [#allocation3], 128, 128, 8
    $region5: #{tpu_custom_call.1} parent=1 // pred_fallthru
      _
    // Predicated region
    $region6: #{tpu_custom_call.1} parent=1 // pred_check
      _
    $region7: #{tpu_custom_call.1} parent=1 // pred_check_branch
      %21 = sbr.rel (0) target = $region9
    $region8: #{tpu_custom_call.1} parent=1 // pred_region
      %22 = dma.done [#allocation3], 256
    $region9: #{tpu_custom_call.1} parent=1 // pred_fallthru
      _
    %v23 = vld [vmem:[#allocation2] sm:$0xff]
    %v24 = vld [vmem:[#allocation2 + $0x8] sm:$0xff]
    %v25 = vxor.u32 %v23, 2147483648
    %v26 = vxor.u32 %v24, 2147483648
    %v27 = vmul.f32 %v25, 1.442695
    %v28 = vpow.pop %v27
    %v29 = vmul.f32 %v26, 1.442695
    %v30 = vpow.pop %v29
    %v31 = vadd.f32 %v28, 1.0
    %v32 = vadd.f32 %v30, 1.0
    %v33 = vrcp.pop %v31
    %v34 = vmul.f32 1.0, %v33
    %v35 = vrcp.pop %v32
    %v36 = vmul.f32 1.0, %v35
    %37 = vst [vmem:[#allocation5] sm:$0xff] %v34
    %38 = vst [vmem:[#allocation5 + $0x8] sm:$0xff] %v36
    // Predicated region
    $region10: #{tpu_custom_call.1} parent=1 // pred_check
      _
    $region11: #{tpu_custom_call.1} parent=1 // pred_check_branch
      %40 = sbr.rel (0) target = $region13
    $region12: #{tpu_custom_call.1} parent=1 // pred_region
      %s42 = ssub.s32 256, 256
      %43 = vsyncadd [#allocation4], %s42
      %s44 = sshll.u32 [#allocation5], 4
      %s45 = int_to_ptr.vmem [resolvable:$true] %s44
      %50 = dma.vmem_to_hbm [thread:$0]  %s45, 256, %s1, [#allocation4], 128, 128, 8
    $region13: #{tpu_custom_call.1} parent=1 // pred_fallthru
      _
    // Predicated region
    $region14: #{tpu_custom_call.1} parent=1 // pred_check
      _
    $region15: #{tpu_custom_call.1} parent=1 // pred_check_branch
      %52 = sbr.rel (0) target = $region17
    $region16: #{tpu_custom_call.1} parent=1 // pred_region
      %53 = dma.done [#allocation4], 256
    $region17: #{tpu_custom_call.1} parent=1 // pred_fallthru
      _
    %54 = vsyncpa [#allocation3], 1
    %55 = vsyncpa [#allocation4], 1

</llo_original>
